<compile_context>
chip_gen: v7x
topology: tpu7x:2x2x1
jax: 0.10.0
libtpu: 0.0.40
codegen_flags: <defaults>
</compile_context>

<pallas_src>
import jax
import jax.numpy as jnp
from jax.experimental import pallas as pl
from jax.experimental.pallas import tpu as pltpu


def _round_up(x, m):
    return ((x + m - 1) // m) * m


def _vmem_params():
    """Generation-aware scoped-VMEM limit + tile-selection budget (bytes)."""
    cap = 64 * 1024 * 1024            # conservative fallback = v7x per-TC VMEM
    try:
        cap = int(pltpu.get_tpu_info().vmem_capacity_bytes)
    except Exception:                 # not on TPU / API drift: stay conservative
        pass
    # Scoped limit: <= half of physical (v7x: 32 of 64 MiB; v5e/v6e: 32 of 128)
    # and above v5e's 16 MiB default so 512-row tiles compile there too.
    limit = min(32 * 1024 * 1024, cap // 2)
    budget = limit // 2               # keep ~2x headroom under the limit
    return limit, budget, cap


def _pick_tile_m(M, K_pad, N_pad, in_bytes, out_bytes, budget, big_vmem):
    """Largest 128-aligned row tile that fits the VMEM budget, capped so large
    M gets >= ~4 grid steps (>= 2 per TensorCore under v7x megacore)."""
    # Per-step pipeline footprint: double-buffered patch + output tiles plus
    # the VMEM-resident (but still double-buffered) weight and bias.
    fixed = 2 * K_pad * N_pad * in_bytes + 2 * N_pad * 4
    candidates = (1024, 512, 256, 128) if big_vmem else (512, 256, 128)
    tm = 128
    for cand in candidates:
        if fixed + 2 * cand * (K_pad * in_bytes + N_pad * out_bytes) <= budget:
            tm = cand
            break
    if M <= 128:
        # Tiny problem: one grid step, minimal row padding (16-row bf16 packing).
        return min(tm, _round_up(max(M, 16), 16))
    # 128-aligned cap near M/4: >= ~4 grid steps so the default double buffer
    # hides the patch DMA on each core, and M_pad - M stays small (v5e cares).
    cap = max(128, _round_up(pl.cdiv(M, 4), 128))
    return min(tm, cap)


# ----------------------------- Pallas kernel ---------------------------------
def _patch_embed_kernel(p_ref, w_ref, b_ref, o_ref):
    # p_ref: (tm, K_pad)    patch rows, bf16, K ordered (kh, kw, in_ch)
    # w_ref: (K_pad, N_pad) reshaped conv weight, bf16 (VMEM-resident)
    # b_ref: (1, N_pad)     conv bias, f32
    # o_ref: (tm, N_pad)    output tile, out_dtype (bf16 by default)
    acc = jnp.dot(p_ref[...], w_ref[...], preferred_element_type=jnp.float32)
    o_ref[...] = (acc + b_ref[...]).astype(o_ref.dtype)


def patch_embed_pallas(patches, w_mat, bias, *, tm, out_dtype, vmem_limit_bytes):
    """patches: (M_pad, K_pad), w_mat: (K_pad, N_pad), bias: (1, N_pad)
    -> (M_pad, N_pad) in out_dtype."""
    M_pad, K_pad = patches.shape
    _, N_pad = w_mat.shape
    assert M_pad % tm == 0
    in_bytes = patches.dtype.itemsize
    out_bytes = jnp.dtype(out_dtype).itemsize
    cost = pl.CostEstimate(
        flops=2 * M_pad * K_pad * N_pad,
        transcendentals=0,
        bytes_accessed=(M_pad * K_pad * in_bytes          # patch rows
                        + K_pad * N_pad * in_bytes        # weight (resident)
                        + N_pad * 4                       # bias
                        + M_pad * N_pad * out_bytes),     # output
    )
    return pl.pallas_call(
        _patch_embed_kernel,
        out_shape=jax.ShapeDtypeStruct((M_pad, N_pad), out_dtype),
        grid_spec=pltpu.PrefetchScalarGridSpec(
            num_scalar_prefetch=0,
            grid=(M_pad // tm,),
            in_specs=[
                pl.BlockSpec((tm, K_pad), lambda i: (i, 0)),
                # Constant index maps -> block index never changes, so Pallas
                # elides per-step re-DMA; weight/bias stay resident in VMEM.
                pl.BlockSpec((K_pad, N_pad), lambda i: (0, 0)),
                pl.BlockSpec((1, N_pad), lambda i: (0, 0)),
            ],
            out_specs=pl.BlockSpec((tm, N_pad), lambda i: (i, 0)),
        ),
        compiler_params=pltpu.CompilerParams(
            dimension_semantics=("parallel",),
            vmem_limit_bytes=vmem_limit_bytes,
            # Allow XLA to fuse the cast/reshape/transpose/pad producer of the
            # patch operand into the kernel's input DMA (removes the HBM round
            # trip for the materialized patch matrix).  Weight/bias are
            # precomputed constants, so no fusion there.
            allow_input_fusion=[True, False, False],
        ),
        cost_estimate=cost,
    )(patches, w_mat, bias)


# ----------------------------- Module wrapper ---------------------------------
class PatchEmbedJAX:
    """JAX/Pallas equivalent of the PyTorch PatchEmbed (flatten=True, no norm).

    Numerics contract: bf16 MXU inputs, f32 accumulation, bf16 output by
    default (set compute_dtype / out_dtype to jnp.float32 for f32 parity).
    """

    def __init__(self, img_size=16, patch_size=8, in_chans=4, embed_dim=128,
                 bias=True, key=None, compute_dtype=jnp.bfloat16,
                 out_dtype=jnp.bfloat16):
        self.patch_size = (patch_size, patch_size)
        self.img_size = (img_size, img_size)
        self.grid_size = (img_size // patch_size, img_size // patch_size)
        self.num_patches = self.grid_size[0] * self.grid_size[1]
        self.in_chans = in_chans
        self.embed_dim = embed_dim
        self.compute_dtype = compute_dtype
        self.out_dtype = out_dtype

        if key is None:
            key = jax.random.PRNGKey(0)
        kw, kb = jax.random.split(key)
        # Conv2d weight layout (torch): (out_ch, in_ch, kh, kw)
        fan_in = in_chans * patch_size * patch_size
        bound = 1.0 / (fan_in ** 0.5)
        self.weight = jax.random.uniform(
            kw, (embed_dim, in_chans, patch_size, patch_size),
            minval=-bound, maxval=bound, dtype=jnp.float32)
        if bias:
            self.bias = jax.random.uniform(
                kb, (embed_dim,), minval=-bound, maxval=bound, dtype=jnp.float32)
        else:
            self.bias = jnp.zeros((embed_dim,), jnp.float32)
        # TODO(synk): norm_layer is Identity here (module default norm_layer=None);
        # dynamic_img_pad / non-strict img sizes / resample_patch_embed are not
        # part of this forward path.

        # Precompute padded matmul operands once (not per forward):
        #   weight (O, C, kh, kw) -> (kh, kw, C, O) -> (K, O): K ordered
        #   (kh, kw, in_ch), channels innermost; zero-pad K/N to lane multiples.
        #   bias   (O,) -> (1, N_pad), kept f32 (bias add stays f32).
        K = in_chans * patch_size * patch_size
        self._K = K
        self._K_pad = _round_up(K, 128)
        self._N_pad = _round_up(embed_dim, 128)
        w_mat = jnp.transpose(self.weight, (2, 3, 1, 0)).reshape(K, embed_dim)
        w_mat = w_mat.astype(compute_dtype)
        self._w_mat = jnp.pad(
            w_mat, ((0, self._K_pad - K), (0, self._N_pad - embed_dim)))
        self._b_mat = jnp.pad(
            self.bias.astype(jnp.float32),
            (0, self._N_pad - embed_dim)).reshape(1, self._N_pad)

        self._vmem_limit, self._vmem_budget, cap = _vmem_params()
        self._big_vmem = cap >= 100 * 1024 * 1024   # v5e/v6e (128 MiB per TC)

    def __call__(self, x):
        # x: (B, C, H, W)  (NCHW, matching PyTorch)
        B, C, H, W = x.shape
        assert H == self.img_size[0] and W == self.img_size[1], "strict_img_size"
        ph, pw = self.patch_size
        gh, gw = H // ph, W // pw
        M = B * gh * gw
        K, K_pad, N_pad = self._K, self._K_pad, self._N_pad

        # --- glue: extract non-overlapping patches.  bf16 cast happens FIRST
        # so the relayout moves half the bytes; K is ordered (kh, kw, in_ch) to
        # match the weight layout above.  With allow_input_fusion this whole
        # chain (cast/reshape/transpose/pad) can fuse into the kernel input DMA
        # instead of being materialized in HBM.
        # TODO(synk): fully in-kernel patch extraction (grid over (B, gh) with a
        # (ph, W, C) slab per step) needs an in-VMEM relayout that does not
        # lower reliably for sub-lane-width pw*C, so the glue stays in XLA.
        p = x.astype(self.compute_dtype).reshape(B, C, gh, ph, gw, pw)
        p = jnp.transpose(p, (0, 2, 4, 3, 5, 1)).reshape(M, K)

        # --- pad rows to a multiple of the chosen 128-aligned MXU tile.
        tm = _pick_tile_m(M, K_pad, N_pad,
                          in_bytes=jnp.dtype(self.compute_dtype).itemsize,
                          out_bytes=jnp.dtype(self.out_dtype).itemsize,
                          budget=self._vmem_budget, big_vmem=self._big_vmem)
        M_pad = _round_up(M, tm)
        p = jnp.pad(p, ((0, M_pad - M), (0, K_pad - K)))

        out = patch_embed_pallas(p, self._w_mat, self._b_mat, tm=tm,
                                 out_dtype=self.out_dtype,
                                 vmem_limit_bytes=self._vmem_limit)
        # Strip padding; NLC output (B, num_patches, embed_dim)
        # == x.flatten(2).transpose(1, 2) of the conv output.
        if M_pad != M:
            out = out[:M]
        if N_pad != self.embed_dim:
            # Lane slice (extra relayout) only taken when embed_dim % 128 != 0.
            out = out[:, :self.embed_dim]
        return out.reshape(B, gh * gw, self.embed_dim)


# ----------------------------- Main -------------------------------------------
if __name__ == "__main__":
    key = jax.random.PRNGKey(0)
    k_x, k_mod = jax.random.split(key)

    B, C, H, W = 2, 4, 16, 16
    patch_size, embed_dim = 8, 128

    x = jax.random.normal(k_x, (B, C, H, W), dtype=jnp.float32)

    mod = PatchEmbedJAX(img_size=H, patch_size=patch_size, in_chans=C,
                        embed_dim=embed_dim, bias=True, key=k_mod)

    out = jax.block_until_ready(mod(x))

    # Reference: strided conv on bf16-rounded inputs (matches the kernel's MXU
    # input dtype; both accumulate in f32), then flatten + transpose to NLC.
    x_r = x.astype(jnp.bfloat16).astype(jnp.float32)
    w_r = mod.weight.astype(jnp.bfloat16).astype(jnp.float32)
    ref = jax.lax.conv_general_dilated(
        x_r, w_r, window_strides=(patch_size, patch_size), padding="VALID",
        dimension_numbers=("NCHW", "OIHW", "NCHW"),
        precision=jax.lax.Precision.HIGHEST)
    ref = ref + mod.bias.reshape(1, embed_dim, 1, 1)
    ref = ref.reshape(B, embed_dim, -1).transpose(0, 2, 1)

    gh = H // patch_size
    assert out.shape == (B, gh * gh, embed_dim)
    assert out.dtype == jnp.dtype(mod.out_dtype)
    assert jnp.allclose(out.astype(jnp.float32), ref, atol=3e-2, rtol=3e-2), \
        "mismatch vs reference conv"

    print("KERNEL_OK")
</pallas_src>

<mosaic_0001>
module attributes {stable_mosaic.version = 11 : i64} {
  func.func @_patch_embed_kernel(%arg0: i32, %arg1: memref<16x256xbf16, #tpu.memory_space<vmem>>, %arg2: memref<256x128xbf16, #tpu.memory_space<vmem>>, %arg3: memref<1x128xf32, #tpu.memory_space<vmem>>, %arg4: memref<16x128xbf16, #tpu.memory_space<vmem>>) attributes {dimension_semantics = [#tpu.dimension_semantics<parallel>], iteration_bounds = array<i64: 1>, scalar_prefetch = 0 : i64, scratch_operands = 0 : i64, tpu.core_type = #tpu.core_type<tc>, window_params = [{transform_indices = @transform_0, window_bounds = array<i64: 16, 256>}, {pipeline_mode = #tpu.pipeline_mode<synchronous>, transform_indices = @transform_1, window_bounds = array<i64: 256, 128>}, {pipeline_mode = #tpu.pipeline_mode<synchronous>, transform_indices = @transform_2, window_bounds = array<i64: 1, 128>}, {transform_indices = @transform_3, window_bounds = array<i64: 16, 128>}]} {
    %c0 = arith.constant 0 : index
    %c0_0 = arith.constant 0 : index
    %0 = vector.load %arg1[%c0, %c0_0] : memref<16x256xbf16, #tpu.memory_space<vmem>>, vector<16x256xbf16>
    %c0_1 = arith.constant 0 : index
    %c0_2 = arith.constant 0 : index
    %1 = vector.load %arg2[%c0_1, %c0_2] : memref<256x128xbf16, #tpu.memory_space<vmem>>, vector<256x128xbf16>
    %cst = arith.constant dense<0.000000e+00> : vector<16x128xf32>
    %2 = tpu.matmul %0, %1, %cst {dimension_numbers = #tpu.dot_dimension_numbers<[1], [0], [0], [1], [0, 0, 1, 1], [], []>} : vector<16x256xbf16>, vector<256x128xbf16>, vector<16x128xf32> -> vector<16x128xf32>
    %c0_3 = arith.constant 0 : index
    %c0_4 = arith.constant 0 : index
    %3 = vector.load %arg3[%c0_3, %c0_4] : memref<1x128xf32, #tpu.memory_space<vmem>>, vector<1x128xf32>
    %4 = vector.broadcast %3 : vector<1x128xf32> to vector<16x128xf32>
    %5 = arith.addf %2, %4 : vector<16x128xf32>
    %6 = arith.truncf %5 : vector<16x128xf32> to vector<16x128xbf16>
    %c0_5 = arith.constant 0 : index
    %c0_6 = arith.constant 0 : index
    %7 = vector.load %arg4[%c0_5, %c0_6] : memref<16x128xbf16, #tpu.memory_space<vmem>>, vector<16x128xbf16>
    tpu.vector_store %arg4[%c0_5, %c0_6], %6 {strides = array<i32>} : memref<16x128xbf16, #tpu.memory_space<vmem>>, vector<16x128xbf16>,
    return
  }
  func.func @transform_0(%arg0: i32) -> (i32, i32) {
    %c0_i32 = arith.constant 0 : i32
    %c0_i32_0 = arith.constant 0 : i32
    return %arg0, %c0_i32 : i32, i32
  }
  func.func @transform_1(%arg0: i32) -> (i32, i32) {
    %c0_i32 = arith.constant 0 : i32
    %c0_i32_0 = arith.constant 0 : i32
    %c0_i32_1 = arith.constant 0 : i32
    return %c0_i32, %c0_i32_0 : i32, i32
  }
  func.func @transform_2(%arg0: i32) -> (i32, i32) {
    %c0_i32 = arith.constant 0 : i32
    %c0_i32_0 = arith.constant 0 : i32
    %c0_i32_1 = arith.constant 0 : i32
    return %c0_i32, %c0_i32_0 : i32, i32
  }
  func.func @transform_3(%arg0: i32) -> (i32, i32) {
    %c0_i32 = arith.constant 0 : i32
    %c0_i32_0 = arith.constant 0 : i32
    return %arg0, %c0_i32 : i32, i32
  }
}

</mosaic_0001>

<llo_original>
// kernel: tpu_custom_call.1
$region0: #{tpu_custom_call.1}
  #allocation0 [shape = 'u32[]', space=smem, size = 0x4, offset = 0x4, fixed_abs, tag = 'smem constant byte address 0x4 - core index']
  #allocation1 [shape = 'u32[144,128]{1,0:T(1,128)}', space=vmem, size = 0x12000, scoped, tag = 'internal scratch']
  %s0 = inlined_call_operand.hbm [shape: bf16[16,256], index: 0, kind: input, shape index: {}]
  %s1 = inlined_call_operand.hbm [shape: bf16[256,128], index: 1, kind: input, shape index: {}]
  %s2 = inlined_call_operand.vmem [shape: f32[1,128], index: 2, kind: input, shape index: {}]
  %s3 = inlined_call_operand.hbm [shape: bf16[16,128], index: 3, kind: output, shape index: {}]
  %s4 = sld [smem:[#allocation0]]
  $region30: #{tpu_custom_call.1} parent=0
    _
  %s6 = ssub.s32 1, %s4
  %s7 = scalar_select 0, %s6, %s4
  $region1: #{tpu_custom_call.1} parent=0
    #allocation2 [shape = 'u8[8192]{0}', space=vmem, size = 0x2000, scoped, tag = 'input window, operand 0, single buffered']
    #allocation3 [shape = 's32[1]{0}', space=sflag, size = 0x4, scoped, tag = 'scoped memory for tpu_custom_call.1']
    #allocation4 [shape = 's32[1]{0}', space=sflag, size = 0x4, scoped, tag = 'scoped memory for tpu_custom_call.1']
    #allocation5 [shape = 'u8[65536]{0}', space=vmem, size = 0x10000, scoped, tag = 'input window, operand 1, single buffered']
    #allocation6 [shape = 's32[1]{0}', space=sflag, size = 0x4, scoped, tag = 'scoped memory for tpu_custom_call.1']
    #allocation7 [shape = 'u8[4096]{0}', space=vmem, size = 0x1000, scoped, tag = 'output window, operand 0, single buffered']
    %8 = vsyncpa [#allocation3], 0
    %9 = vsyncpa [#allocation6], 0
    %10 = vsyncpa [#allocation4], 0
    // Predicated region
    $region2: #{tpu_custom_call.1} parent=1 // pred_check
      _
    $region3: #{tpu_custom_call.1} parent=1 // pred_check_branch
      %12 = sbr.rel (0) target = $region5
    $region4: #{tpu_custom_call.1} parent=1 // pred_region
      %s14 = ssub.s32 256, 256
      %15 = vsyncadd [#allocation3], %s14
      %s16 = sshll.u32 [#allocation2], 4
      %s17 = int_to_ptr.vmem [resolvable:$true] %s16
      %22 = dma.hbm_to_vmem [thread:$0]  %s0, 256, %s17, [#allocation3], 128, 128, 8
    $region5: #{tpu_custom_call.1} parent=1 // pred_fallthru
      _
    // Predicated region
    $region6: #{tpu_custom_call.1} parent=1 // pred_check
      _
    $region7: #{tpu_custom_call.1} parent=1 // pred_check_branch
      %24 = sbr.rel (0) target = $region9
    $region8: #{tpu_custom_call.1} parent=1 // pred_region
      %s26 = ssub.s32 2048, 2048
      %27 = vsyncadd [#allocation6], %s26
      %s28 = sshll.u32 [#allocation5], 4
      %s29 = int_to_ptr.vmem [resolvable:$true] %s28
      %34 = dma.hbm_to_vmem [thread:$0]  %s1, 2048, %s29, [#allocation6], 64, 64, 4
    $region9: #{tpu_custom_call.1} parent=1 // pred_fallthru
      _
    // Predicated region
    $region10: #{tpu_custom_call.1} parent=1 // pred_check
      _
    $region11: #{tpu_custom_call.1} parent=1 // pred_check_branch
      %36 = sbr.rel (0) target = $region13
    $region12: #{tpu_custom_call.1} parent=1 // pred_region
      _
    $region13: #{tpu_custom_call.1} parent=1 // pred_fallthru
      _
    // Predicated region
    $region14: #{tpu_custom_call.1} parent=1 // pred_check
      _
    $region15: #{tpu_custom_call.1} parent=1 // pred_check_branch
      %38 = sbr.rel (0) target = $region17
    $region16: #{tpu_custom_call.1} parent=1 // pred_region
      %39 = dma.done [#allocation3], 256
    $region17: #{tpu_custom_call.1} parent=1 // pred_fallthru
      _
    // Predicated region
    $region18: #{tpu_custom_call.1} parent=1 // pred_check
      _
    $region19: #{tpu_custom_call.1} parent=1 // pred_check_branch
      %41 = sbr.rel (0) target = $region21
    $region20: #{tpu_custom_call.1} parent=1 // pred_region
      %42 = dma.done [#allocation6], 2048
    $region21: #{tpu_custom_call.1} parent=1 // pred_fallthru
      _
    %v44 = vld [vmem:[#allocation2] sm:$0xff]
    %v45 = vld [vmem:[#allocation2 + $0x8] sm:$0xff]
    %v46 = vld [vmem:[#allocation5] sm:$0xf]
    %v47 = vld [vmem:[#allocation5 + $0x4] sm:$0xf]
    %v48 = vld [vmem:[#allocation5 + $0x8] sm:$0xf]
    %v49 = vld [vmem:[#allocation5 + $0xc] sm:$0xf]
    %v50 = vld [vmem:[#allocation5 + $0x10] sm:$0xf]
    %v51 = vld [vmem:[#allocation5 + $0x14] sm:$0xf]
    %v52 = vld [vmem:[#allocation5 + $0x18] sm:$0xf]
    %v53 = vld [vmem:[#allocation5 + $0x1c] sm:$0xf]
    %v54 = vld [vmem:[#allocation5 + $0x20] sm:$0xf]
    %v55 = vld [vmem:[#allocation5 + $0x24] sm:$0xf]
    %v56 = vld [vmem:[#allocation5 + $0x28] sm:$0xf]
    %v57 = vld [vmem:[#allocation5 + $0x2c] sm:$0xf]
    %v58 = vld [vmem:[#allocation5 + $0x30] sm:$0xf]
    %v59 = vld [vmem:[#allocation5 + $0x34] sm:$0xf]
    %v60 = vld [vmem:[#allocation5 + $0x38] sm:$0xf]
    %v61 = vld [vmem:[#allocation5 + $0x3c] sm:$0xf]
    %v62 = vld [vmem:[#allocation5 + $0x40] sm:$0xf]
    %v63 = vld [vmem:[#allocation5 + $0x44] sm:$0xf]
    %v64 = vld [vmem:[#allocation5 + $0x48] sm:$0xf]
    %v65 = vld [vmem:[#allocation5 + $0x4c] sm:$0xf]
    %v66 = vld [vmem:[#allocation5 + $0x50] sm:$0xf]
    %v67 = vld [vmem:[#allocation5 + $0x54] sm:$0xf]
    %v68 = vld [vmem:[#allocation5 + $0x58] sm:$0xf]
    %v69 = vld [vmem:[#allocation5 + $0x5c] sm:$0xf]
    %v70 = vld [vmem:[#allocation5 + $0x60] sm:$0xf]
    %v71 = vld [vmem:[#allocation5 + $0x64] sm:$0xf]
    %v72 = vld [vmem:[#allocation5 + $0x68] sm:$0xf]
    %v73 = vld [vmem:[#allocation5 + $0x6c] sm:$0xf]
    %v74 = vld [vmem:[#allocation5 + $0x70] sm:$0xf]
    %v75 = vld [vmem:[#allocation5 + $0x74] sm:$0xf]
    %v76 = vld [vmem:[#allocation5 + $0x78] sm:$0xf]
    %v77 = vld [vmem:[#allocation5 + $0x7c] sm:$0xf]
    %v78 = vld [vmem:[%s2] sm:$0x1]
    %v80 = vlaneseq
    %v81 = vshrl.u32 %v80, 7
    %v82 = vsub.s32 0, %v81
    %v83 = vrot.slane %v78, %v82
    %v87 = vunpack.c.l.b16 %v44
    %v88 = vunpack.c.h.b16 %v44
    %v89 = vunpack.c.l.b16 %v45
    %v90 = vunpack.c.h.b16 %v45
    %v91 = vpack.c.b16 %v89, %v87
    %v92 = vpack.c.b16 %v90, %v88
    %v127 = vunpack.c.l.b16 %v46
    %v128 = vunpack.c.l.b16 %v47
    %v129 = vunpack.c.l.b16 %v48
    %v130 = vunpack.c.l.b16 %v49
    %v131 = vunpack.c.l.b16 %v50
    %v132 = vunpack.c.l.b16 %v51
    %v133 = vunpack.c.l.b16 %v52
    %v134 = vunpack.c.l.b16 %v53
    %v135 = vunpack.c.l.b16 %v54
    %v136 = vunpack.c.l.b16 %v55
    %v137 = vunpack.c.l.b16 %v56
    %v138 = vunpack.c.l.b16 %v57
    %v139 = vunpack.c.l.b16 %v58
    %v140 = vunpack.c.l.b16 %v59
    %v141 = vunpack.c.l.b16 %v60
    %v142 = vunpack.c.l.b16 %v61
    %v143 = vunpack.c.l.b16 %v62
    %v144 = vunpack.c.l.b16 %v63
    %v145 = vunpack.c.l.b16 %v64
    %v146 = vunpack.c.l.b16 %v65
    %v147 = vunpack.c.l.b16 %v66
    %v148 = vunpack.c.l.b16 %v67
    %v149 = vunpack.c.l.b16 %v68
    %v150 = vunpack.c.l.b16 %v69
    %v151 = vunpack.c.l.b16 %v70
    %v152 = vunpack.c.l.b16 %v71
    %v153 = vunpack.c.l.b16 %v72
    %v154 = vunpack.c.l.b16 %v73
    %v155 = vunpack.c.l.b16 %v74
    %v156 = vunpack.c.l.b16 %v75
    %v157 = vunpack.c.l.b16 %v76
    %v158 = vunpack.c.l.b16 %v77
    %v159 = vpack.c.b16 %v128, %v127
    %v160 = vpack.c.b16 %v130, %v129
    %v161 = vpack.c.b16 %v132, %v131
    %v162 = vpack.c.b16 %v134, %v133
    %v163 = vpack.c.b16 %v136, %v135
    %v164 = vpack.c.b16 %v138, %v137
    %v165 = vpack.c.b16 %v140, %v139
    %v166 = vpack.c.b16 %v142, %v141
    %v167 = vpack.c.b16 %v144, %v143
    %v168 = vpack.c.b16 %v146, %v145
    %v169 = vpack.c.b16 %v148, %v147
    %v170 = vpack.c.b16 %v150, %v149
    %v171 = vpack.c.b16 %v152, %v151
    %v172 = vpack.c.b16 %v154, %v153
    %v173 = vpack.c.b16 %v156, %v155
    %v174 = vpack.c.b16 %v158, %v157
    %191 = vmatprep.subr.bf16.mxu0 0
    %192 = vmatpush1.bf16.msra.mxu0 %v159
    %193 = vmatprep.subr.bf16.mxu0 0
    %194 = vmatpush1.bf16.msra.mxu0 %v160
    %195 = vmatprep.subr.bf16.mxu0 0
    %196 = vmatpush1.bf16.msra.mxu0 %v161
    %197 = vmatprep.subr.bf16.mxu0 0
    %198 = vmatpush1.bf16.msra.mxu0 %v162
    %199 = vmatprep.subr.bf16.mxu0 0
    %200 = vmatpush1.bf16.msra.mxu0 %v163
    %201 = vmatprep.subr.bf16.mxu0 0
    %202 = vmatpush1.bf16.msra.mxu0 %v164
    %203 = vmatprep.subr.bf16.mxu0 0
    %204 = vmatpush1.bf16.msra.mxu0 %v165
    %205 = vmatprep.subr.bf16.mxu0 0
    %206 = vmatpush1.bf16.msra.mxu0 %v166
    %207 = vmatprep.subr.bf16.mxu0 0
    %208 = vmatpush1.bf16.msra.mxu0 %v167
    %209 = vmatprep.subr.bf16.mxu0 0
    %210 = vmatpush1.bf16.msra.mxu0 %v168
    %211 = vmatprep.subr.bf16.mxu0 0
    %212 = vmatpush1.bf16.msra.mxu0 %v169
    %213 = vmatprep.subr.bf16.mxu0 0
    %214 = vmatpush1.bf16.msra.mxu0 %v170
    %215 = vmatprep.subr.bf16.mxu0 0
    %216 = vmatpush1.bf16.msra.mxu0 %v171
    %217 = vmatprep.subr.bf16.mxu0 0
    %218 = vmatpush1.bf16.msra.mxu0 %v172
    %219 = vmatprep.subr.bf16.mxu0 0
    %220 = vmatpush1.bf16.msra.mxu0 %v173
    %221 = vmatprep.subr.bf16.mxu0 0
    %222 = vmatpush1.bf16.msra.mxu0 %v174
    %223 = vmatprep.mubr.bf16.mxu0 %v92
    %224 = vmatmul.mubr.bf16.gmra.mrb[0].mxu0 %v91
    %v225 = vpop.f32.mrb[0].mxu0
    %v226 = vadd.f32 %v83, %v225
    %v227 = vpop.f32.mrb[0].mxu0
    %v228 = vpop.f32.mrb[0].mxu0
    %v229 = vadd.f32 %v83, %v228
    %v230 = vpop.f32.mrb[0].mxu0
    %231 = vdwg.mxu0
    %v232 = vpack.c.bf16 %v229, %v226
    %v234 = vunpack.c.l.b16 %v232
    %v235 = vunpack.c.h.b16 %v232
    %v236 = vpack.c.b16 %v234, %v234
    %v237 = vpack.c.b16 %v235, %v235
    %240 = vst [vmem:[#allocation7] sm:$0xf] %v236
    %241 = vst [vmem:[#allocation7 + $0x4] sm:$0xf] %v237
    // Predicated region
    $region22: #{tpu_custom_call.1} parent=1 // pred_check
      _
    $region23: #{tpu_custom_call.1} parent=1 // pred_check_branch
      %243 = sbr.rel (0) target = $region25
    $region24: #{tpu_custom_call.1} parent=1 // pred_region
      %s245 = ssub.s32 128, 128
      %246 = vsyncadd [#allocation4], %s245
      %s247 = sshll.u32 [#allocation7], 4
      %s248 = int_to_ptr.vmem [resolvable:$true] %s247
      %253 = dma.vmem_to_hbm [thread:$0]  %s248, 128, %s3, [#allocation4], 64, 64, 4
    $region25: #{tpu_custom_call.1} parent=1 // pred_fallthru
      _
    // Predicated region
    $region26: #{tpu_custom_call.1} parent=1 // pred_check
      _
    $region27: #{tpu_custom_call.1} parent=1 // pred_check_branch
      %255 = sbr.rel (0) target = $region29
    $region28: #{tpu_custom_call.1} parent=1 // pred_region
      %256 = dma.done [#allocation4], 128
    $region29: #{tpu_custom_call.1} parent=1 // pred_fallthru
      _
    %257 = vsyncpa [#allocation3], 1
    %258 = vsyncpa [#allocation6], 1
    %259 = vsyncpa [#allocation4], 1

</llo_original>
